<compile_context>
chip_gen: v7x
topology: tpu7x:2x2x1
jax: 0.10.0
libtpu: 0.0.40
codegen_flags: <defaults>
</compile_context>

<pallas_src>
import jax
import jax.numpy as jnp
import numpy as np
from jax import lax
from jax.experimental import pallas as pl
from jax.experimental.pallas import tpu as pltpu

NEG_SLOPE = -9.821


def _round_up(x, m):
    return (x + m - 1) // m * m


def _phase_taps(K, s, p, ph):
    """Kernel taps contributing to output positions oh with oh % s == ph.

    Returns [(k, d)] such that y[s*q + ph] += x[q + d] * w[k]
    (transposed-conv relation ih = (oh + p - k) / s).
    """
    taps = []
    for k in range(K):
        if (ph + p - k) % s == 0:
            taps.append((k, (ph + p - k) // s))
    return taps


# -----------------------------------------------------------------------------
# One-time weight preparation (single gather, no per-call scatter ops)
# -----------------------------------------------------------------------------
def prepare_convt_weight(w_iohw, stride=2, padding=1):
    """Phase-decomposed weight matrix (s*s*C_out, KKC_pad) in bf16.

    Row order  : (ph, pw, co)                  -- the conv+pixel-shuffle identity.
    Column order: (dh - dmin, dw - dmin, ci)   -- matches the im2col patch order.
    Built from a static numpy index table with ONE jnp.take; call once,
    outside jit (depends only on the weights).
    """
    C_in, C_out, K, Kw = w_iohw.shape
    assert K == Kw
    s, p = stride, padding
    taps = [_phase_taps(K, s, p, ph) for ph in range(s)]
    d_all = [d for t in taps for (_, d) in t]
    dmin, dmax = min(d_all), max(d_all)
    # The uniform TxT window assumption only holds for combos like (K=5,s=2,p=1).
    assert dmin <= 0 <= dmax, "phase decomposition not valid for these params"
    T = dmax - dmin + 1
    KKC = T * T * C_in
    CO4 = s * s * C_out
    KKC_pad = _round_up(KKC, 16)          # bf16 sublane tile; CO4 left unpadded
    n_w = C_in * C_out * K * K

    idx = np.full((CO4, KKC_pad), n_w, dtype=np.int32)   # sentinel -> 0.0
    for ph in range(s):
        for (kh, dh) in taps[ph]:
            for pw in range(s):
                for (kw, dw) in taps[pw]:
                    row0 = (ph * s + pw) * C_out
                    col0 = ((dh - dmin) * T + (dw - dmin)) * C_in
                    for co in range(C_out):
                        for ci in range(C_in):
                            idx[row0 + co, col0 + ci] = (
                                (ci * C_out + co) * K + kh) * K + kw

    w_flat = jnp.concatenate(
        [w_iohw.reshape(-1), jnp.zeros((1,), w_iohw.dtype)])
    w_mat = jnp.take(w_flat, jnp.asarray(idx), axis=0).astype(jnp.bfloat16)

    meta = dict(stride=s, padding=p, K=K, T=T, dmin=dmin,
                C_in=C_in, C_out=C_out, KKC=KKC, KKC_pad=KKC_pad, CO4=CO4)
    return w_mat, meta


# -----------------------------------------------------------------------------
# Pallas kernel: fused matmul + leaky(where) epilogue, lane-dense output
# -----------------------------------------------------------------------------
def _convt_leaky_kernel(w_ref, p_ref, o_ref):
    # w_ref: (CO4, KKC_pad) bf16 (resident)   p_ref: (KKC_pad, TM) bf16
    # o_ref: (CO4, TM) f32  -- TM is a multiple of 128 -> unmasked vst
    acc = jnp.dot(w_ref[...], p_ref[...], preferred_element_type=jnp.float32)
    o_ref[...] = jnp.where(acc > 0, acc, acc * NEG_SLOPE).astype(o_ref.dtype)


def _choose_m_tiling(M):
    """One grid step per TensorCore (v7x has 2 TCs; v5e/v6e have 1)."""
    kind = ""
    try:
        kind = jax.devices()[0].device_kind.lower()
    except Exception:
        pass
    n_min = 2 if "v7" in kind else 1
    tm_cap = 4096                    # still only ~MB-scale blocks at the cap
    tm = min(tm_cap, _round_up(pl.cdiv(M, n_min), 128))
    m_pad = _round_up(M, tm)
    return tm, m_pad


def conv_transpose2d_leaky_pallas(x_nchw, w_mat, meta):
    """ConvTranspose2d(bias=False) + where(x>0, x, -9.821*x), fused.

    x_nchw : (N, C_in, H, W) f32
    w_mat  : prepared weight matrix from prepare_convt_weight
    returns: x4 in NCHW, (N, C_out, OH, OW) f32
    """
    N, C_in, H, W = x_nchw.shape
    s, p, K, T, dmin = (meta["stride"], meta["padding"], meta["K"],
                        meta["T"], meta["dmin"])
    C_out, KKC, KKC_pad, CO4 = (meta["C_out"], meta["KKC"],
                                meta["KKC_pad"], meta["CO4"])
    assert C_in == meta["C_in"]
    OH = (H - 1) * s - 2 * p + K
    OW = (W - 1) * s - 2 * p + K
    Qh, Qw = pl.cdiv(OH, s), pl.cdiv(OW, s)        # per-phase output grid
    M = N * Qh * Qw
    TM, M_pad = _choose_m_tiling(M)

    # ---- im2col, already in (tap, ci) x (n, qh, qw) order (no extra HBM
    #      transpose of the 9x patch tensor) -------------------------------
    pad_b = -dmin
    Hp, Wp = Qh + T - 1, Qw + T - 1
    assert Hp - pad_b - H >= 0 and Wp - pad_b - W >= 0
    x_cn = jnp.transpose(x_nchw, (1, 0, 2, 3)).astype(jnp.bfloat16)  # (C,N,H,W)
    x_pad = jnp.pad(x_cn, ((0, 0), (0, 0),
                           (pad_b, Hp - pad_b - H),
                           (pad_b, Wp - pad_b - W)))
    cols = [x_pad[:, :, a:a + Qh, b:b + Qw]
            for a in range(T) for b in range(T)]               # (C,N,Qh,Qw) each
    pt = jnp.stack(cols, axis=0).reshape(KKC, M)               # (KKC, M) bf16
    pt = jnp.pad(pt, ((0, KKC_pad - KKC), (0, M_pad - M)))

    # ---- single fused matmul + leaky, tiled over the long (lane) axis -----
    grid = (M_pad // TM,)
    out_t = pl.pallas_call(
        _convt_leaky_kernel,
        out_shape=jax.ShapeDtypeStruct((CO4, M_pad), jnp.float32),
        grid=grid,
        in_specs=[
            pl.BlockSpec((CO4, KKC_pad), lambda i: (0, 0)),    # resident weights
            pl.BlockSpec((KKC_pad, TM), lambda i: (0, i)),
        ],
        out_specs=pl.BlockSpec((CO4, TM), lambda i: (0, i)),
        compiler_params=pltpu.CompilerParams(
            dimension_semantics=("parallel",)),                # shards TCs on v7x
    )(w_mat, pt)

    # ---- phase de-interleave (pixel-shuffle identity): one transpose ------
    y = out_t[:, :M].reshape(s, s, C_out, N, Qh, Qw)           # (ph,pw,co,n,qh,qw)
    x4 = jnp.transpose(y, (3, 2, 4, 0, 5, 1)).reshape(N, C_out, s * Qh, s * Qw)
    return x4[:, :, :OH, :OW]                                  # (N, C_out, OH, OW)


def model_forward(x12, w_mat, meta):
    # x1 = conv_t(x12); x4 = where(x1>0, x1, -9.821*x1)  (fused in the kernel)
    x4 = conv_transpose2d_leaky_pallas(x12, w_mat, meta)       # NCHW
    N, C_out, OH, OW = x4.shape
    r = 3
    # x6 = torch.transpose(x4, 2, 3) is dead code (not returned) -> dropped.
    # pixel_shuffle(transpose(x4, 1, 3), 3) composed into ONE transpose:
    #   out[n, cp, 3*oh+i, 3*co+j] = x4[n, co, oh, 9*cp + 3*i + j]
    out = x4.reshape(N, C_out, OH, OW // (r * r), r, r)
    out = jnp.transpose(out, (0, 3, 2, 4, 1, 5))
    return out.reshape(N, OW // (r * r), OH * r, C_out * r)


# -----------------------------------------------------------------------------
# Pure-JAX reference (XLA dilated conv) for correctness checking
# -----------------------------------------------------------------------------
def _pixel_shuffle_ref(x, r):
    N, C, H, W = x.shape
    x = x.reshape(N, C // (r * r), r, r, H, W)
    x = jnp.transpose(x, (0, 1, 4, 2, 5, 3))
    return x.reshape(N, C // (r * r), H * r, W * r)


def model_forward_ref(x12, w_iohw, stride=2, padding=1):
    C_in, C_out, K, _ = w_iohw.shape
    pad_eff = K - 1 - padding
    w_oihw = jnp.transpose(w_iohw, (1, 0, 2, 3))[:, :, ::-1, ::-1]
    x1 = lax.conv_general_dilated(
        x12, w_oihw, window_strides=(1, 1),
        padding=[(pad_eff, pad_eff), (pad_eff, pad_eff)],
        lhs_dilation=(stride, stride),
        dimension_numbers=("NCHW", "OIHW", "NCHW"))
    x4 = jnp.where(x1 > 0, x1, x1 * NEG_SLOPE)
    x5 = jnp.transpose(x4, (0, 3, 2, 1))
    return _pixel_shuffle_ref(x5, 3)


if __name__ == "__main__":
    key = jax.random.PRNGKey(0)
    kx, kw = jax.random.split(key)

    # NCHW input, C_in=2.  W=13 chosen so the transposed-conv width
    # (2*W+1 = 27) is divisible by pixel_shuffle factor 3**2; the module's own
    # (2, 2, 24, 99) input would make pixel_shuffle invalid (199 % 9 != 0).
    x12 = jax.random.normal(kx, (2, 2, 24, 13), dtype=jnp.float32)

    # ConvTranspose2d(2, 6, 5, bias=False) weight: (in=2, out=6, 5, 5)
    fan = 2 * 5 * 5
    bound = 1.0 / np.sqrt(fan)
    w = jax.random.uniform(kw, (2, 6, 5, 5), jnp.float32, -bound, bound)

    # Weight matrix assembled once (single gather) outside the jitted forward.
    w_mat, meta = prepare_convt_weight(w, stride=2, padding=1)

    fwd = jax.jit(lambda x: model_forward(x, w_mat, meta))
    out = jax.block_until_ready(fwd(x12))
    assert out.shape == (2, 3, 147, 18), out.shape

    # Tight check against a reference with identically bf16-rounded operands.
    ref_bf = model_forward_ref(
        x12.astype(jnp.bfloat16).astype(jnp.float32),
        w.astype(jnp.bfloat16).astype(jnp.float32))
    np.testing.assert_allclose(np.asarray(out), np.asarray(ref_bf),
                               rtol=1e-3, atol=1e-3)

    # Loose check against the full-f32 reference (bf16 MXU operands).
    ref_32 = model_forward_ref(x12, w)
    np.testing.assert_allclose(np.asarray(out), np.asarray(ref_32),
                               rtol=5e-2, atol=5e-2)

    print("KERNEL_OK")
</pallas_src>

<mosaic_0001>
module attributes {stable_mosaic.version = 11 : i64} {
  func.func @_convt_leaky_kernel(%arg0: i32, %arg1: memref<24x32xbf16, #tpu.memory_space<vmem>>, %arg2: memref<32x768xbf16, #tpu.memory_space<vmem>>, %arg3: memref<24x768xf32, #tpu.memory_space<vmem>>) attributes {dimension_semantics = [#tpu.dimension_semantics<parallel>], iteration_bounds = array<i64: 1>, scalar_prefetch = 0 : i64, scratch_operands = 0 : i64, tpu.core_type = #tpu.core_type<tc>, window_params = [{pipeline_mode = #tpu.pipeline_mode<synchronous>, transform_indices = @transform_0, window_bounds = array<i64: 24, 32>}, {transform_indices = @transform_1, window_bounds = array<i64: 32, 768>}, {transform_indices = @transform_2, window_bounds = array<i64: 24, 768>}]} {
    %c0 = arith.constant 0 : index
    %c0_0 = arith.constant 0 : index
    %0 = vector.load %arg1[%c0, %c0_0] : memref<24x32xbf16, #tpu.memory_space<vmem>>, vector<24x32xbf16>
    %c0_1 = arith.constant 0 : index
    %c0_2 = arith.constant 0 : index
    %1 = vector.load %arg2[%c0_1, %c0_2] : memref<32x768xbf16, #tpu.memory_space<vmem>>, vector<32x768xbf16>
    %cst = arith.constant dense<0.000000e+00> : vector<24x768xf32>
    %2 = tpu.matmul %0, %1, %cst {dimension_numbers = #tpu.dot_dimension_numbers<[1], [0], [0], [1], [0, 0, 1, 1], [], []>} : vector<24x32xbf16>, vector<32x768xbf16>, vector<24x768xf32> -> vector<24x768xf32>
    %cst_3 = arith.constant 0.000000e+00 : f32
    %3 = vector.broadcast %cst_3 : f32 to vector<24x768xf32>
    %4 = arith.cmpf ogt, %2, %3 : vector<24x768xf32>
    %cst_4 = arith.constant -9.821000e+00 : f32
    %5 = vector.broadcast %cst_4 : f32 to vector<24x768xf32>
    %6 = arith.mulf %2, %5 : vector<24x768xf32>
    %7 = arith.select %4, %2, %6 : vector<24x768xi1>, vector<24x768xf32>
    %c0_5 = arith.constant 0 : index
    %c0_6 = arith.constant 0 : index
    %8 = vector.load %arg3[%c0_5, %c0_6] : memref<24x768xf32, #tpu.memory_space<vmem>>, vector<24x768xf32>
    tpu.vector_store %arg3[%c0_5, %c0_6], %7 {strides = array<i32>} : memref<24x768xf32, #tpu.memory_space<vmem>>, vector<24x768xf32>,
    return
  }
  func.func @transform_0(%arg0: i32) -> (i32, i32) {
    %c0_i32 = arith.constant 0 : i32
    %c0_i32_0 = arith.constant 0 : i32
    %c0_i32_1 = arith.constant 0 : i32
    return %c0_i32, %c0_i32_0 : i32, i32
  }
  func.func @transform_1(%arg0: i32) -> (i32, i32) {
    %c0_i32 = arith.constant 0 : i32
    %c0_i32_0 = arith.constant 0 : i32
    return %c0_i32, %arg0 : i32, i32
  }
  func.func @transform_2(%arg0: i32) -> (i32, i32) {
    %c0_i32 = arith.constant 0 : i32
    %c0_i32_0 = arith.constant 0 : i32
    return %c0_i32, %arg0 : i32, i32
  }
}

</mosaic_0001>

<llo_original>
// kernel: _lambda_.1
$region0: #{_lambda_.1}
  #allocation0 [shape = 'u32[]', space=smem, size = 0x4, offset = 0x4, fixed_abs, tag = 'smem constant byte address 0x4 - core index']
  #allocation1 [shape = 'u32[144,128]{1,0:T(1,128)}', space=vmem, size = 0x12000, scoped, tag = 'internal scratch']
  %s0 = inlined_call_operand.hbm [shape: bf16[24,32], index: 0, kind: input, shape index: {}]
  %s1 = inlined_call_operand.vmem [shape: bf16[32,768], index: 1, kind: input, shape index: {}]
  %s2 = inlined_call_operand.vmem [shape: f32[24,768], index: 2, kind: output, shape index: {}]
  %s3 = sld [smem:[#allocation0]]
  $region22: #{_lambda_.1} parent=0
    _
  %s5 = ssub.s32 1, %s3
  %s6 = scalar_select 0, %s5, %s3
  $region1: #{_lambda_.1} parent=0
    #allocation2 [shape = 'u8[6144]{0}', space=vmem, size = 0x1800, scoped, tag = 'input window, operand 0, single buffered']
    #allocation3 [shape = 's32[1]{0}', space=sflag, size = 0x4, scoped, tag = 'scoped memory for _lambda_.1']
    %7 = vsyncpa [#allocation3], 0
    // Predicated region
    $region2: #{_lambda_.1} parent=1 // pred_check
      _
    $region3: #{_lambda_.1} parent=1 // pred_check_branch
      %9 = sbr.rel (0) target = $region5
    $region4: #{_lambda_.1} parent=1 // pred_region
      %s11 = ssub.s32 192, 192
      %12 = vsyncadd [#allocation3], %s11
      %s13 = sshll.u32 [#allocation2], 4
      %s14 = int_to_ptr.vmem [resolvable:$true] %s13
      %19 = dma.hbm_to_vmem [thread:$0]  %s0, 192, %s14, [#allocation3], 64, 64, 4
    $region5: #{_lambda_.1} parent=1 // pred_fallthru
      _
    // Predicated region
    $region6: #{_lambda_.1} parent=1 // pred_check
      _
    $region7: #{_lambda_.1} parent=1 // pred_check_branch
      %21 = sbr.rel (0) target = $region9
    $region8: #{_lambda_.1} parent=1 // pred_region
      _
    $region9: #{_lambda_.1} parent=1 // pred_fallthru
      _
    // Predicated region
    $region10: #{_lambda_.1} parent=1 // pred_check
      _
    $region11: #{_lambda_.1} parent=1 // pred_check_branch
      %23 = sbr.rel (0) target = $region13
    $region12: #{_lambda_.1} parent=1 // pred_region
      %24 = dma.done [#allocation3], 192
    $region13: #{_lambda_.1} parent=1 // pred_fallthru
      _
    %v26 = vld [vmem:[#allocation2] sm:$0xf]
    %v27 = vld [vmem:[#allocation2 + $0x4] sm:$0xf]
    %v28 = vld [vmem:[#allocation2 + $0x8] sm:$0xf]
    %v29 = vld [vmem:[%s1] sm:$0xff]
    %v30 = vld [vmem:[%s1 + $0x8] sm:$0xff]
    %v31 = vld [vmem:[%s1 + $0x10] sm:$0xff]
    %v32 = vld [vmem:[%s1 + $0x18] sm:$0xff]
    %v33 = vld [vmem:[%s1 + $0x20] sm:$0xff]
    %v34 = vld [vmem:[%s1 + $0x28] sm:$0xff]
    %v35 = vld [vmem:[%s1 + $0x30] sm:$0xff]
    %v36 = vld [vmem:[%s1 + $0x38] sm:$0xff]
    %v37 = vld [vmem:[%s1 + $0x40] sm:$0xff]
    %v38 = vld [vmem:[%s1 + $0x48] sm:$0xff]
    %v39 = vld [vmem:[%s1 + $0x50] sm:$0xff]
    %v40 = vld [vmem:[%s1 + $0x58] sm:$0xff]
    %v44 = vunpack.c.l.b16 %v26
    %v45 = vunpack.c.l.b16 %v27
    %v46 = vunpack.c.l.b16 %v28
    %v47 = vpack.c.b16 %v45, %v44
    %v48 = vpack.c.b16 %v46, %v46
    %v61 = vunpack.c.l.b16 %v29
    %v62 = vunpack.c.h.b16 %v29
    %v63 = vunpack.c.l.b16 %v30
    %v64 = vunpack.c.h.b16 %v30
    %v65 = vunpack.c.l.b16 %v31
    %v66 = vunpack.c.h.b16 %v31
    %v67 = vunpack.c.l.b16 %v32
    %v68 = vunpack.c.h.b16 %v32
    %v69 = vunpack.c.l.b16 %v33
    %v70 = vunpack.c.h.b16 %v33
    %v71 = vunpack.c.l.b16 %v34
    %v72 = vunpack.c.h.b16 %v34
    %v73 = vunpack.c.l.b16 %v35
    %v74 = vunpack.c.h.b16 %v35
    %v75 = vunpack.c.l.b16 %v36
    %v76 = vunpack.c.h.b16 %v36
    %v77 = vunpack.c.l.b16 %v37
    %v78 = vunpack.c.h.b16 %v37
    %v79 = vunpack.c.l.b16 %v38
    %v80 = vunpack.c.h.b16 %v38
    %v81 = vunpack.c.l.b16 %v39
    %v82 = vunpack.c.h.b16 %v39
    %v83 = vunpack.c.l.b16 %v40
    %v84 = vunpack.c.h.b16 %v40
    %v85 = vpack.c.b16 %v67, %v61
    %v86 = vpack.c.b16 %v68, %v62
    %v87 = vpack.c.b16 %v69, %v63
    %v88 = vpack.c.b16 %v70, %v64
    %v89 = vpack.c.b16 %v71, %v65
    %v90 = vpack.c.b16 %v72, %v66
    %v91 = vpack.c.b16 %v79, %v73
    %v92 = vpack.c.b16 %v80, %v74
    %v93 = vpack.c.b16 %v81, %v75
    %v94 = vpack.c.b16 %v82, %v76
    %v95 = vpack.c.b16 %v83, %v77
    %v96 = vpack.c.b16 %v84, %v78
    %vm109 = vcmask 261120
    %v111 = vsel %vm109, %v47, 0
    %v114 = vsel %vm109, %v48, 0
    %116 = vmatprep.subr.bf16.mxu0 %v86
    %117 = vmatpush1.bf16.msra.mxu0 %v85
    %118 = vmatprep.subr.bf16.mxu0 %v92
    %119 = vmatpush1.bf16.msra.mxu0 %v91
    %120 = vmatprep.subr.bf16.mxu0 0
    %121 = vmatpush1.bf16.msra.mxu0 0
    %122 = vmatprep.subr.bf16.mxu0 0
    %123 = vmatpush1.bf16.msra.mxu0 0
    %124 = vmatprep.subr.bf16.mxu0 0
    %125 = vmatpush1.bf16.msra.mxu0 0
    %126 = vmatprep.subr.bf16.mxu0 0
    %127 = vmatpush1.bf16.msra.mxu0 0
    %128 = vmatprep.subr.bf16.mxu0 0
    %129 = vmatpush1.bf16.msra.mxu0 0
    %130 = vmatprep.subr.bf16.mxu0 0
    %131 = vmatpush1.bf16.msra.mxu0 0
    %132 = vmatprep.subr.bf16.mxu0 0
    %133 = vmatpush1.bf16.msra.mxu0 0
    %134 = vmatprep.subr.bf16.mxu0 0
    %135 = vmatpush1.bf16.msra.mxu0 0
    %136 = vmatprep.subr.bf16.mxu0 0
    %137 = vmatpush1.bf16.msra.mxu0 0
    %138 = vmatprep.subr.bf16.mxu0 0
    %139 = vmatpush1.bf16.msra.mxu0 0
    %140 = vmatprep.subr.bf16.mxu0 0
    %141 = vmatpush1.bf16.msra.mxu0 0
    %142 = vmatprep.subr.bf16.mxu0 0
    %143 = vmatpush1.bf16.msra.mxu0 0
    %144 = vmatprep.subr.bf16.mxu0 0
    %145 = vmatpush1.bf16.msra.mxu0 0
    %146 = vmatprep.subr.bf16.mxu0 0
    %147 = vmatpush1.bf16.msra.mxu0 0
    %148 = vmatprep.mubr.bf16.mxu0 0
    %149 = vmatmul.mubr.bf16.gmra.mrb[0].mxu0 %v111
    %v150 = vpop.f32.mrb[0].mxu0
    %v151 = vadd.f32 0.0, %v150
    %v152 = vpop.f32.mrb[0].mxu0
    %v153 = vadd.f32 0.0, %v152
    %v154 = vpop.f32.mrb[0].mxu0
    %v155 = vadd.f32 0.0, %v154
    %v156 = vpop.f32.mrb[0].mxu0
    %v157 = vadd.f32 0.0, %v156
    %158 = vmatprep.mubr.bf16.mxu0 0
    %159 = vmatmul.mubr.bf16.gmra.mrb[0].mxu0 %v114
    %v160 = vpop.f32.mrb[0].mxu0
    %v161 = vadd.f32 0.0, %v160
    %v162 = vpop.f32.mrb[0].mxu0
    %v163 = vadd.f32 0.0, %v162
    %v164 = vpop.f32.mrb[0].mxu0
    %v165 = vpop.f32.mrb[0].mxu0
    %166 = vdwg.mxu0
    %167 = vmatprep.subr.bf16.mxu0 %v88
    %168 = vmatpush1.bf16.msra.mxu0 %v87
    %169 = vmatprep.subr.bf16.mxu0 %v94
    %170 = vmatpush1.bf16.msra.mxu0 %v93
    %171 = vmatprep.subr.bf16.mxu0 0
    %172 = vmatpush1.bf16.msra.mxu0 0
    %173 = vmatprep.subr.bf16.mxu0 0
    %174 = vmatpush1.bf16.msra.mxu0 0
    %175 = vmatprep.subr.bf16.mxu0 0
    %176 = vmatpush1.bf16.msra.mxu0 0
    %177 = vmatprep.subr.bf16.mxu0 0
    %178 = vmatpush1.bf16.msra.mxu0 0
    %179 = vmatprep.subr.bf16.mxu0 0
    %180 = vmatpush1.bf16.msra.mxu0 0
    %181 = vmatprep.subr.bf16.mxu0 0
    %182 = vmatpush1.bf16.msra.mxu0 0
    %183 = vmatprep.subr.bf16.mxu0 0
    %184 = vmatpush1.bf16.msra.mxu0 0
    %185 = vmatprep.subr.bf16.mxu0 0
    %186 = vmatpush1.bf16.msra.mxu0 0
    %187 = vmatprep.subr.bf16.mxu0 0
    %188 = vmatpush1.bf16.msra.mxu0 0
    %189 = vmatprep.subr.bf16.mxu0 0
    %190 = vmatpush1.bf16.msra.mxu0 0
    %191 = vmatprep.subr.bf16.mxu0 0
    %192 = vmatpush1.bf16.msra.mxu0 0
    %193 = vmatprep.subr.bf16.mxu0 0
    %194 = vmatpush1.bf16.msra.mxu0 0
    %195 = vmatprep.subr.bf16.mxu0 0
    %196 = vmatpush1.bf16.msra.mxu0 0
    %197 = vmatprep.subr.bf16.mxu0 0
    %198 = vmatpush1.bf16.msra.mxu0 0
    %199 = vmatprep.mubr.bf16.mxu0 0
    %200 = vmatmul.mubr.bf16.gmra.mrb[0].mxu0 %v111
    %v201 = vpop.f32.mrb[0].mxu0
    %v202 = vadd.f32 0.0, %v201
    %v203 = vpop.f32.mrb[0].mxu0
    %v204 = vadd.f32 0.0, %v203
    %v205 = vpop.f32.mrb[0].mxu0
    %v206 = vadd.f32 0.0, %v205
    %v207 = vpop.f32.mrb[0].mxu0
    %v208 = vadd.f32 0.0, %v207
    %209 = vmatprep.mubr.bf16.mxu0 0
    %210 = vmatmul.mubr.bf16.gmra.mrb[0].mxu0 %v114
    %v211 = vpop.f32.mrb[0].mxu0
    %v212 = vadd.f32 0.0, %v211
    %v213 = vpop.f32.mrb[0].mxu0
    %v214 = vadd.f32 0.0, %v213
    %v215 = vpop.f32.mrb[0].mxu0
    %v216 = vpop.f32.mrb[0].mxu0
    %217 = vdwg.mxu0
    %218 = vmatprep.subr.bf16.mxu0 %v90
    %219 = vmatpush1.bf16.msra.mxu0 %v89
    %220 = vmatprep.subr.bf16.mxu0 %v96
    %221 = vmatpush1.bf16.msra.mxu0 %v95
    %222 = vmatprep.subr.bf16.mxu0 0
    %223 = vmatpush1.bf16.msra.mxu0 0
    %224 = vmatprep.subr.bf16.mxu0 0
    %225 = vmatpush1.bf16.msra.mxu0 0
    %226 = vmatprep.subr.bf16.mxu0 0
    %227 = vmatpush1.bf16.msra.mxu0 0
    %228 = vmatprep.subr.bf16.mxu0 0
    %229 = vmatpush1.bf16.msra.mxu0 0
    %230 = vmatprep.subr.bf16.mxu0 0
    %231 = vmatpush1.bf16.msra.mxu0 0
    %232 = vmatprep.subr.bf16.mxu0 0
    %233 = vmatpush1.bf16.msra.mxu0 0
    %234 = vmatprep.subr.bf16.mxu0 0
    %235 = vmatpush1.bf16.msra.mxu0 0
    %236 = vmatprep.subr.bf16.mxu0 0
    %237 = vmatpush1.bf16.msra.mxu0 0
    %238 = vmatprep.subr.bf16.mxu0 0
    %239 = vmatpush1.bf16.msra.mxu0 0
    %240 = vmatprep.subr.bf16.mxu0 0
    %241 = vmatpush1.bf16.msra.mxu0 0
    %242 = vmatprep.subr.bf16.mxu0 0
    %243 = vmatpush1.bf16.msra.mxu0 0
    %244 = vmatprep.subr.bf16.mxu0 0
    %245 = vmatpush1.bf16.msra.mxu0 0
    %246 = vmatprep.subr.bf16.mxu0 0
    %247 = vmatpush1.bf16.msra.mxu0 0
    %248 = vmatprep.subr.bf16.mxu0 0
    %249 = vmatpush1.bf16.msra.mxu0 0
    %250 = vmatprep.mubr.bf16.mxu0 0
    %251 = vmatmul.mubr.bf16.gmra.mrb[0].mxu0 %v111
    %v252 = vpop.f32.mrb[0].mxu0
    %v253 = vadd.f32 0.0, %v252
    %v254 = vpop.f32.mrb[0].mxu0
    %v255 = vadd.f32 0.0, %v254
    %v256 = vpop.f32.mrb[0].mxu0
    %v257 = vadd.f32 0.0, %v256
    %v258 = vpop.f32.mrb[0].mxu0
    %v259 = vadd.f32 0.0, %v258
    %260 = vmatprep.mubr.bf16.mxu0 0
    %261 = vmatmul.mubr.bf16.gmra.mrb[0].mxu0 %v114
    %v262 = vpop.f32.mrb[0].mxu0
    %v263 = vadd.f32 0.0, %v262
    %v264 = vpop.f32.mrb[0].mxu0
    %v265 = vadd.f32 0.0, %v264
    %v266 = vpop.f32.mrb[0].mxu0
    %v267 = vpop.f32.mrb[0].mxu0
    %268 = vdwg.mxu0
    %vm269 = vcmp.gt.f32.partialorder %v151, 0.0
    %vm270 = vcmp.gt.f32.partialorder %v153, 0.0
    %vm271 = vcmp.gt.f32.partialorder %v202, 0.0
    %vm272 = vcmp.gt.f32.partialorder %v204, 0.0
    %vm273 = vcmp.gt.f32.partialorder %v253, 0.0
    %vm274 = vcmp.gt.f32.partialorder %v255, 0.0
    %vm275 = vcmp.gt.f32.partialorder %v155, 0.0
    %vm276 = vcmp.gt.f32.partialorder %v157, 0.0
    %vm277 = vcmp.gt.f32.partialorder %v206, 0.0
    %vm278 = vcmp.gt.f32.partialorder %v208, 0.0
    %vm279 = vcmp.gt.f32.partialorder %v257, 0.0
    %vm280 = vcmp.gt.f32.partialorder %v259, 0.0
    %vm281 = vcmp.gt.f32.partialorder %v161, 0.0
    %vm282 = vcmp.gt.f32.partialorder %v163, 0.0
    %vm283 = vcmp.gt.f32.partialorder %v212, 0.0
    %vm284 = vcmp.gt.f32.partialorder %v214, 0.0
    %vm285 = vcmp.gt.f32.partialorder %v263, 0.0
    %vm286 = vcmp.gt.f32.partialorder %v265, 0.0
    %v287 = vmul.f32 %v151, -9.821
    %v288 = vmul.f32 %v153, -9.821
    %v289 = vmul.f32 %v202, -9.821
    %v290 = vmul.f32 %v204, -9.821
    %v291 = vmul.f32 %v253, -9.821
    %v292 = vmul.f32 %v255, -9.821
    %v293 = vmul.f32 %v155, -9.821
    %v294 = vmul.f32 %v157, -9.821
    %v295 = vmul.f32 %v206, -9.821
    %v296 = vmul.f32 %v208, -9.821
    %v297 = vmul.f32 %v257, -9.821
    %v298 = vmul.f32 %v259, -9.821
    %v299 = vmul.f32 %v161, -9.821
    %v300 = vmul.f32 %v163, -9.821
    %v301 = vmul.f32 %v212, -9.821
    %v302 = vmul.f32 %v214, -9.821
    %v303 = vmul.f32 %v263, -9.821
    %v304 = vmul.f32 %v265, -9.821
    %v305 = vsel %vm269, %v151, %v287
    %v306 = vsel %vm270, %v153, %v288
    %v307 = vsel %vm271, %v202, %v289
    %v308 = vsel %vm272, %v204, %v290
    %v309 = vsel %vm273, %v253, %v291
    %v310 = vsel %vm274, %v255, %v292
    %v311 = vsel %vm275, %v155, %v293
    %v312 = vsel %vm276, %v157, %v294
    %v313 = vsel %vm277, %v206, %v295
    %v314 = vsel %vm278, %v208, %v296
    %v315 = vsel %vm279, %v257, %v297
    %v316 = vsel %vm280, %v259, %v298
    %v317 = vsel %vm281, %v161, %v299
    %v318 = vsel %vm282, %v163, %v300
    %v319 = vsel %vm283, %v212, %v301
    %v320 = vsel %vm284, %v214, %v302
    %v321 = vsel %vm285, %v263, %v303
    %v322 = vsel %vm286, %v265, %v304
    %323 = vst [vmem:[%s2] sm:$0xff] %v305
    %324 = vst [vmem:[%s2 + $0x8] sm:$0xff] %v306
    %325 = vst [vmem:[%s2 + $0x10] sm:$0xff] %v307
    %326 = vst [vmem:[%s2 + $0x18] sm:$0xff] %v308
    %327 = vst [vmem:[%s2 + $0x20] sm:$0xff] %v309
    %328 = vst [vmem:[%s2 + $0x28] sm:$0xff] %v310
    %329 = vst [vmem:[%s2 + $0x30] sm:$0xff] %v311
    %330 = vst [vmem:[%s2 + $0x38] sm:$0xff] %v312
    %331 = vst [vmem:[%s2 + $0x40] sm:$0xff] %v313
    %332 = vst [vmem:[%s2 + $0x48] sm:$0xff] %v314
    %333 = vst [vmem:[%s2 + $0x50] sm:$0xff] %v315
    %334 = vst [vmem:[%s2 + $0x58] sm:$0xff] %v316
    %335 = vst [vmem:[%s2 + $0x60] sm:$0xff] %v317
    %336 = vst [vmem:[%s2 + $0x68] sm:$0xff] %v318
    %337 = vst [vmem:[%s2 + $0x70] sm:$0xff] %v319
    %338 = vst [vmem:[%s2 + $0x78] sm:$0xff] %v320
    %339 = vst [vmem:[%s2 + $0x80] sm:$0xff] %v321
    %340 = vst [vmem:[%s2 + $0x88] sm:$0xff] %v322
    // Predicated region
    $region14: #{_lambda_.1} parent=1 // pred_check
      _
    $region15: #{_lambda_.1} parent=1 // pred_check_branch
      %342 = sbr.rel (0) target = $region17
    $region16: #{_lambda_.1} parent=1 // pred_region
      _
    $region17: #{_lambda_.1} parent=1 // pred_fallthru
      _
    // Predicated region
    $region18: #{_lambda_.1} parent=1 // pred_check
      _
    $region19: #{_lambda_.1} parent=1 // pred_check_branch
      %344 = sbr.rel (0) target = $region21
    $region20: #{_lambda_.1} parent=1 // pred_region
      _
    $region21: #{_lambda_.1} parent=1 // pred_fallthru
      _
    %345 = vsyncpa [#allocation3], 1

</llo_original>
